<compile_context>
chip_gen: v6e
topology: v6e:2x2x1
jax: 0.10.0
libtpu: 0.0.40
codegen_flags: <defaults>
</compile_context>

<pallas_src>
import functools
import math

import jax
import jax.numpy as jnp
from jax import lax
from jax.experimental import pallas as pl
from jax.experimental.pallas import tpu as pltpu

_INV_SQRT2 = 1.0 / math.sqrt(2.0)
_MIB = 1024 * 1024


def _round_up(v, m):
    return ((v + m - 1) // m) * m


def _vmem_limit_bytes():
    """Generation-aware scoped-VMEM request.

    Leaves headroom on v7x (64 MiB physical per TensorCore) and goes high on
    v5e/v6e (128 MiB physical).
    """
    try:
        cap = pltpu.get_tpu_info().vmem_capacity_bytes
    except Exception:  # conservative fallback if the query is unavailable
        cap = 64 * _MIB
    return int(max(32 * _MIB, min(cap - 16 * _MIB, 100 * _MIB)))


def _head_transform_kernel(x_ref, w_ref, b_ref, g_ref, beta_ref, o_ref, acc_ref, *, eps):
    """One (row-tile, k-tile) grid step.

    acc_ref accumulates x @ W^T in f32 across the K (hidden-in) grid axis; the
    gelu + LayerNorm epilogue runs once, on the final K step.
    """
    k = pl.program_id(1)

    @pl.when(k == 0)
    def _():
        acc_ref[...] = jnp.zeros_like(acc_ref)

    # Operands stay in their native dtype (bf16 stays bf16 on the MXU); f32 acc.
    acc_ref[...] += jnp.dot(x_ref[...], w_ref[...], preferred_element_type=jnp.float32)

    @pl.when(k == pl.num_programs(1) - 1)
    def _():
        h = acc_ref[...] + b_ref[...].astype(jnp.float32)
        # erf-based gelu (exact PyTorch formulation).  The leading 0.5 is dropped:
        # the LayerNorm that follows is invariant to a uniform scale of its input
        # (eps=1e-12 is negligible vs. the variance), so the output is unchanged.
        h = h * (1.0 + lax.erf(h * _INV_SQRT2))
        # Single-pass LayerNorm statistics: var = E[h^2] - mean^2, f32 math.
        mean = jnp.mean(h, axis=-1, keepdims=True)
        mean_sq = jnp.mean(h * h, axis=-1, keepdims=True)
        var = jnp.maximum(mean_sq - mean * mean, 0.0)
        h = (h - mean) * lax.rsqrt(var + eps)
        h = h * g_ref[...].astype(jnp.float32) + beta_ref[...].astype(jnp.float32)
        o_ref[...] = h.astype(o_ref.dtype)


def visual_prediction_head_transform(x, weight, bias, gamma, beta, *, eps=1e-12, tm=512):
    """x: [..., H]; weight: [H_out, H_in] (PyTorch nn.Linear layout)."""
    orig_shape = x.shape
    H = orig_shape[-1]
    x2d = x.reshape(-1, H)
    N = x2d.shape[0]
    out_dtype = x.dtype

    # One-time HBM transpose to [H_in, H_out]: the kernel contracts (1, 0) so no
    # per-tile transpose of the weight happens inside the kernel body.
    w_t = weight.T
    # Native bf16 MXU path when the activations are bf16 (also halves resident
    # weight VMEM and its DMA); keep f32 weights exact for f32 activations.
    if x.dtype == jnp.bfloat16 and w_t.dtype != jnp.bfloat16:
        w_t = w_t.astype(jnp.bfloat16)
    w_itemsize = jnp.dtype(w_t.dtype).itemsize

    vmem_limit = _vmem_limit_bytes()

    # --- K (hidden-in) tiling: keep the whole weight resident when it comfortably
    # fits, otherwise stream (tk, H) weight slabs along an "arbitrary" grid axis.
    if H * H * w_itemsize <= vmem_limit // 2:
        tk = H
    else:
        tk = 0
        for cand in (1024, 768, 512, 384, 256, 128):
            if cand < H and H % cand == 0:
                tk = cand
                break
        if tk == 0:
            # TODO(synk): H not divisible by a 128-multiple; keep the weight fully
            # resident (may not fit VMEM for very large, oddly-sized hidden dims).
            tk = H
    n_k = 1 if tk == H else H // tk

    # --- Row tiling: multiples of 16 rows (bf16-safe sublane packing), capped by
    # a VMEM budget, then split so >= 2 row tiles exist (v7x megacore) if possible.
    sub = 16
    if N <= sub:
        tm_eff = N  # single block equal to the (small) full row extent
    else:
        tm_eff = max(sub, _round_up(min(tm, N), sub))
        # VMEM budget: weight slabs + double-buffered x/out tiles + f32 acc/temps.
        w_resident = tk * H * w_itemsize * (1 if n_k == 1 else 2)
        per_row = (2 * tk * jnp.dtype(x.dtype).itemsize      # x tile, double-buffered
                   + 2 * H * jnp.dtype(out_dtype).itemsize   # out tile, double-buffered
                   + 2 * H * 4)                              # f32 accumulator + epilogue temps
        budget = vmem_limit - w_resident - 2 * _MIB
        if budget > 0:
            tm_vmem = max(sub, (budget // per_row) // sub * sub)
            tm_eff = min(tm_eff, tm_vmem)
        if pl.cdiv(N, tm_eff) < 2:
            tm_eff = max(sub, _round_up(pl.cdiv(N, 2), sub))

    n_tiles = pl.cdiv(N, tm_eff)
    grid = (n_tiles, n_k)

    b2d = bias.reshape(1, H)
    g2d = gamma.reshape(1, H)
    beta2d = beta.reshape(1, H)

    kernel = functools.partial(_head_transform_kernel, eps=eps)

    def _call(single_buffer_resident):
        def spec(shape, index_map, resident):
            if resident and single_buffer_resident:
                # Constant index map -> a second pipeline buffer is pure VMEM waste.
                return pl.BlockSpec(shape, index_map, pipeline_mode=pl.Buffered(1))
            return pl.BlockSpec(shape, index_map)

        return pl.pallas_call(
            kernel,
            out_shape=jax.ShapeDtypeStruct((N, H), out_dtype),
            grid_spec=pltpu.PrefetchScalarGridSpec(
                num_scalar_prefetch=0,
                grid=grid,
                in_specs=[
                    pl.BlockSpec((tm_eff, tk), lambda i, k: (i, k)),       # x rows (streamed)
                    spec((tk, H), lambda i, k: (k, 0), resident=(n_k == 1)),  # W^T slab
                    spec((1, H), lambda i, k: (0, 0), resident=True),      # bias
                    spec((1, H), lambda i, k: (0, 0), resident=True),      # LN gamma
                    spec((1, H), lambda i, k: (0, 0), resident=True),      # LN beta
                ],
                out_specs=pl.BlockSpec((tm_eff, H), lambda i, k: (i, 0)),
                scratch_shapes=[pltpu.VMEM((tm_eff, H), jnp.float32)],
            ),
            compiler_params=pltpu.CompilerParams(
                dimension_semantics=("parallel", "arbitrary"),
                vmem_limit_bytes=vmem_limit,
            ),
        )(x2d, w_t, b2d, g2d, beta2d)

    try:
        out = _call(single_buffer_resident=True)
    except Exception:
        # pipeline_mode=pl.Buffered(1) rejected by this jax/Mosaic version; fall
        # back to default (double-buffered) resident operands.
        out = _call(single_buffer_resident=False)

    return out.reshape(orig_shape)


if __name__ == "__main__":
    batch, seq, hidden = 2, 8, 32
    eps = 1e-12

    key = jax.random.PRNGKey(0)
    k_x, k_w, k_b = jax.random.split(key, 3)

    # Deterministic synthetic parameters (shapes from nn.Linear(H, H) + LayerNorm(H))
    x = jax.random.normal(k_x, (batch, seq, hidden), dtype=jnp.float32)
    weight = jax.random.normal(k_w, (hidden, hidden), dtype=jnp.float32) * 0.02  # [out, in]
    bias = jax.random.normal(k_b, (hidden,), dtype=jnp.float32) * 0.02
    gamma = jnp.ones((hidden,), dtype=jnp.float32)
    beta = jnp.zeros((hidden,), dtype=jnp.float32)

    out = visual_prediction_head_transform(x, weight, bias, gamma, beta, eps=eps)
    out = jax.block_until_ready(out)

    # Pure-JAX reference check (exact PyTorch formulation: erf gelu + two-pass LN)
    h_ref = x @ weight.T + bias
    h_ref = h_ref * 0.5 * (1.0 + lax.erf(h_ref / math.sqrt(2.0)))
    mu = jnp.mean(h_ref, axis=-1, keepdims=True)
    var = jnp.mean(jnp.square(h_ref - mu), axis=-1, keepdims=True)
    ref = (h_ref - mu) * lax.rsqrt(var + eps) * gamma + beta

    assert out.shape == x.shape
    assert jnp.allclose(out, ref, atol=1e-5, rtol=1e-5)

    print("KERNEL_OK")
</pallas_src>

<mosaic_0001>
module attributes {stable_mosaic.version = 11 : i64} {
  func.func @_head_transform_kernel(%arg0: i32, %arg1: i32, %arg2: memref<16x32xf32, #tpu.memory_space<vmem>>, %arg3: memref<32x32xf32, #tpu.memory_space<vmem>>, %arg4: memref<1x32xf32, #tpu.memory_space<vmem>>, %arg5: memref<1x32xf32, #tpu.memory_space<vmem>>, %arg6: memref<1x32xf32, #tpu.memory_space<vmem>>, %arg7: memref<16x32xf32, #tpu.memory_space<vmem>>, %arg8: memref<16x32xf32, #tpu.memory_space<vmem>>) attributes {dimension_semantics = [#tpu.dimension_semantics<parallel>, #tpu.dimension_semantics<arbitrary>], iteration_bounds = array<i64: 1, 1>, scalar_prefetch = 0 : i64, scratch_operands = 1 : i64, tpu.core_type = #tpu.core_type<tc>, window_params = [{transform_indices = @transform_0, window_bounds = array<i64: 16, 32>}, {pipeline_mode = #tpu.pipeline_mode<synchronous>, transform_indices = @transform_1, window_bounds = array<i64: 32, 32>}, {pipeline_mode = #tpu.pipeline_mode<synchronous>, transform_indices = @transform_2, window_bounds = array<i64: 1, 32>}, {pipeline_mode = #tpu.pipeline_mode<synchronous>, transform_indices = @transform_3, window_bounds = array<i64: 1, 32>}, {pipeline_mode = #tpu.pipeline_mode<synchronous>, transform_indices = @transform_4, window_bounds = array<i64: 1, 32>}, {transform_indices = @transform_5, window_bounds = array<i64: 16, 32>}]} {
    %c0_i32 = arith.constant 0 : i32
    %0 = arith.cmpi eq, %arg1, %c0_i32 : i32
    %1 = arith.extui %0 : i1 to i32
    %c0_i32_0 = arith.constant 0 : i32
    %2 = arith.cmpi ne, %1, %c0_i32_0 : i32
    scf.if %2 {
      %cst_10 = arith.constant 0.000000e+00 : f32
      %12 = vector.broadcast %cst_10 : f32 to vector<16x32xf32>
      %c0_11 = arith.constant 0 : index
      %c0_12 = arith.constant 0 : index
      %13 = vector.load %arg8[%c0_11, %c0_12] : memref<16x32xf32, #tpu.memory_space<vmem>>, vector<16x32xf32>
      tpu.vector_store %arg8[%c0_11, %c0_12], %12 {strides = array<i32>} : memref<16x32xf32, #tpu.memory_space<vmem>>, vector<16x32xf32>,
    } else {
    }
    %c0 = arith.constant 0 : index
    %c0_1 = arith.constant 0 : index
    %3 = vector.load %arg8[%c0, %c0_1] : memref<16x32xf32, #tpu.memory_space<vmem>>, vector<16x32xf32>
    %c0_2 = arith.constant 0 : index
    %c0_3 = arith.constant 0 : index
    %4 = vector.load %arg2[%c0_2, %c0_3] : memref<16x32xf32, #tpu.memory_space<vmem>>, vector<16x32xf32>
    %c0_4 = arith.constant 0 : index
    %c0_5 = arith.constant 0 : index
    %5 = vector.load %arg3[%c0_4, %c0_5] : memref<32x32xf32, #tpu.memory_space<vmem>>, vector<32x32xf32>
    %cst = arith.constant dense<0.000000e+00> : vector<16x32xf32>
    %6 = tpu.matmul %4, %5, %cst {dimension_numbers = #tpu.dot_dimension_numbers<[1], [0], [0], [1], [0, 0, 1, 1], [], []>} : vector<16x32xf32>, vector<32x32xf32>, vector<16x32xf32> -> vector<16x32xf32>
    %7 = arith.addf %3, %6 : vector<16x32xf32>
    %c0_6 = arith.constant 0 : index
    %c0_7 = arith.constant 0 : index
    %8 = vector.load %arg8[%c0_6, %c0_7] : memref<16x32xf32, #tpu.memory_space<vmem>>, vector<16x32xf32>
    tpu.vector_store %arg8[%c0_6, %c0_7], %7 {strides = array<i32>} : memref<16x32xf32, #tpu.memory_space<vmem>>, vector<16x32xf32>,
    %c0_i32_8 = arith.constant 0 : i32
    %9 = arith.cmpi eq, %arg1, %c0_i32_8 : i32
    %10 = arith.extui %9 : i1 to i32
    %c0_i32_9 = arith.constant 0 : i32
    %11 = arith.cmpi ne, %10, %c0_i32_9 : i32
    scf.if %11 {
      %c0_10 = arith.constant 0 : index
      %c0_11 = arith.constant 0 : index
      %12 = vector.load %arg8[%c0_10, %c0_11] : memref<16x32xf32, #tpu.memory_space<vmem>>, vector<16x32xf32>
      %c0_12 = arith.constant 0 : index
      %c0_13 = arith.constant 0 : index
      %13 = vector.load %arg4[%c0_12, %c0_13] : memref<1x32xf32, #tpu.memory_space<vmem>>, vector<1x32xf32>
      %14 = vector.broadcast %13 : vector<1x32xf32> to vector<16x32xf32>
      %15 = arith.addf %12, %14 : vector<16x32xf32>
      %cst_14 = arith.constant 0.707106769 : f32
      %16 = vector.broadcast %cst_14 : f32 to vector<16x32xf32>
      %17 = arith.mulf %15, %16 : vector<16x32xf32>
      %18 = math.erf %17 : vector<16x32xf32>
      %cst_15 = arith.constant 1.000000e+00 : f32
      %19 = vector.broadcast %cst_15 : f32 to vector<16x32xf32>
      %20 = arith.addf %19, %18 : vector<16x32xf32>
      %21 = arith.mulf %15, %20 : vector<16x32xf32>
      %cst_16 = arith.constant dense<0.000000e+00> : vector<16xf32>
      %22 = vector.multi_reduction <add>, %21, %cst_16 [1] : vector<16x32xf32> to vector<16xf32>
      %23 = vector.shape_cast %22 : vector<16xf32> to vector<16x1xf32>
      %cst_17 = arith.constant 3.200000e+01 : f32
      %24 = vector.broadcast %cst_17 : f32 to vector<16x1xf32>
      %25 = arith.divf %23, %24 : vector<16x1xf32>
      %26 = arith.mulf %21, %21 : vector<16x32xf32>
      %cst_18 = arith.constant dense<0.000000e+00> : vector<16xf32>
      %27 = vector.multi_reduction <add>, %26, %cst_18 [1] : vector<16x32xf32> to vector<16xf32>
      %28 = vector.shape_cast %27 : vector<16xf32> to vector<16x1xf32>
      %cst_19 = arith.constant 3.200000e+01 : f32
      %29 = vector.broadcast %cst_19 : f32 to vector<16x1xf32>
      %30 = arith.divf %28, %29 : vector<16x1xf32>
      %31 = arith.mulf %25, %25 : vector<16x1xf32>
      %32 = arith.subf %30, %31 : vector<16x1xf32>
      %cst_20 = arith.constant 0.000000e+00 : f32
      %33 = vector.broadcast %cst_20 : f32 to vector<16x1xf32>
      %34 = arith.maximumf %32, %33 : vector<16x1xf32>
      %35 = vector.broadcast %25 : vector<16x1xf32> to vector<16x32xf32>
      %36 = arith.subf %21, %35 : vector<16x32xf32>
      %cst_21 = arith.constant 9.99999996E-13 : f32
      %37 = vector.broadcast %cst_21 : f32 to vector<16x1xf32>
      %38 = arith.addf %34, %37 : vector<16x1xf32>
      %39 = math.rsqrt %38 : vector<16x1xf32>
      %40 = vector.broadcast %39 : vector<16x1xf32> to vector<16x32xf32>
      %41 = arith.mulf %36, %40 : vector<16x32xf32>
      %c0_22 = arith.constant 0 : index
      %c0_23 = arith.constant 0 : index
      %42 = vector.load %arg5[%c0_22, %c0_23] : memref<1x32xf32, #tpu.memory_space<vmem>>, vector<1x32xf32>
      %43 = vector.broadcast %42 : vector<1x32xf32> to vector<16x32xf32>
      %44 = arith.mulf %41, %43 : vector<16x32xf32>
      %c0_24 = arith.constant 0 : index
      %c0_25 = arith.constant 0 : index
      %45 = vector.load %arg6[%c0_24, %c0_25] : memref<1x32xf32, #tpu.memory_space<vmem>>, vector<1x32xf32>
      %46 = vector.broadcast %45 : vector<1x32xf32> to vector<16x32xf32>
      %47 = arith.addf %44, %46 : vector<16x32xf32>
      %c0_26 = arith.constant 0 : index
      %c0_27 = arith.constant 0 : index
      %48 = vector.load %arg7[%c0_26, %c0_27] : memref<16x32xf32, #tpu.memory_space<vmem>>, vector<16x32xf32>
      tpu.vector_store %arg7[%c0_26, %c0_27], %47 {strides = array<i32>} : memref<16x32xf32, #tpu.memory_space<vmem>>, vector<16x32xf32>,
    } else {
    }
    return
  }
  func.func @transform_0(%arg0: i32, %arg1: i32) -> (i32, i32) {
    %c0_i32 = arith.constant 0 : i32
    return %arg0, %arg1 : i32, i32
  }
  func.func @transform_1(%arg0: i32, %arg1: i32) -> (i32, i32) {
    %c0_i32 = arith.constant 0 : i32
    %c0_i32_0 = arith.constant 0 : i32
    return %arg1, %c0_i32 : i32, i32
  }
  func.func @transform_2(%arg0: i32, %arg1: i32) -> (i32, i32) {
    %c0_i32 = arith.constant 0 : i32
    %c0_i32_0 = arith.constant 0 : i32
    %c0_i32_1 = arith.constant 0 : i32
    return %c0_i32, %c0_i32_0 : i32, i32
  }
  func.func @transform_3(%arg0: i32, %arg1: i32) -> (i32, i32) {
    %c0_i32 = arith.constant 0 : i32
    %c0_i32_0 = arith.constant 0 : i32
    %c0_i32_1 = arith.constant 0 : i32
    return %c0_i32, %c0_i32_0 : i32, i32
  }
  func.func @transform_4(%arg0: i32, %arg1: i32) -> (i32, i32) {
    %c0_i32 = arith.constant 0 : i32
    %c0_i32_0 = arith.constant 0 : i32
    %c0_i32_1 = arith.constant 0 : i32
    return %c0_i32, %c0_i32_0 : i32, i32
  }
  func.func @transform_5(%arg0: i32, %arg1: i32) -> (i32, i32) {
    %c0_i32 = arith.constant 0 : i32
    %c0_i32_0 = arith.constant 0 : i32
    return %arg0, %c0_i32 : i32, i32
  }
}

module attributes {stable_mosaic.version = 11 : i64} {
  func.func @_head_transform_kernel(%arg0: i32, %arg1: i32, %arg2: memref<16x32xf32, #tpu.memory_space<vmem>>, %arg3: memref<32x32xf32, #tpu.memory_space<vmem>>, %arg4: memref<1x32xf32, #tpu.memory_space<vmem>>, %arg5: memref<1x32xf32, #tpu.memory_space<vmem>>, %arg6: memref<1x32xf32, #tpu.memory_space<vmem>>, %arg7: memref<16x32xf32, #tpu.memory_space<vmem>>, %arg8: memref<16x32xf32, #tpu.memory_space<vmem>>) attributes {dimension_semantics = [#tpu.dimension_semantics<parallel>, #tpu.dimension_semantics<arbitrary>], iteration_bounds = array<i64: 1, 1>, scalar_prefetch = 0 : i64, scratch_operands = 1 : i64, tpu.core_type = #tpu.core_type<tc>, window_params = [{transform_indices = @transform_0, window_bounds = array<i64: 16, 32>}, {transform_indices = @transform_1, window_bounds = array<i64: 32, 32>}, {pipeline_mode = #tpu.pipeline_mode<synchronous>, transform_indices = @transform_2, window_bounds = array<i64: 1, 32>}, {pipeline_mode = #tpu.pipeline_mode<synchronous>, transform_indices = @transform_3, window_bounds = array<i64: 1, 32>}, {pipeline_mode = #tpu.pipeline_mode<synchronous>, transform_indices = @transform_4, window_bounds = array<i64: 1, 32>}, {transform_indices = @transform_5, window_bounds = array<i64: 16, 32>}]} {
    %c0_i32 = arith.constant 0 : i32
    %0 = arith.cmpi eq, %arg1, %c0_i32 : i32
    %1 = arith.extui %0 : i1 to i32
    %c0_i32_0 = arith.constant 0 : i32
    %2 = arith.cmpi ne, %1, %c0_i32_0 : i32
    scf.if %2 {
      %cst_10 = arith.constant 0.000000e+00 : f32
      %12 = vector.broadcast %cst_10 : f32 to vector<16x32xf32>
      %c0_11 = arith.constant 0 : index
      %c0_12 = arith.constant 0 : index
      %13 = vector.load %arg8[%c0_11, %c0_12] : memref<16x32xf32, #tpu.memory_space<vmem>>, vector<16x32xf32>
      tpu.vector_store %arg8[%c0_11, %c0_12], %12 {strides = array<i32>} : memref<16x32xf32, #tpu.memory_space<vmem>>, vector<16x32xf32>,
    } else {
    }
    %c0 = arith.constant 0 : index
    %c0_1 = arith.constant 0 : index
    %3 = vector.load %arg8[%c0, %c0_1] : memref<16x32xf32, #tpu.memory_space<vmem>>, vector<16x32xf32>
    %c0_2 = arith.constant 0 : index
    %c0_3 = arith.constant 0 : index
    %4 = vector.load %arg2[%c0_2, %c0_3] : memref<16x32xf32, #tpu.memory_space<vmem>>, vector<16x32xf32>
    %c0_4 = arith.constant 0 : index
    %c0_5 = arith.constant 0 : index
    %5 = vector.load %arg3[%c0_4, %c0_5] : memref<32x32xf32, #tpu.memory_space<vmem>>, vector<32x32xf32>
    %cst = arith.constant dense<0.000000e+00> : vector<16x32xf32>
    %6 = tpu.matmul %4, %5, %cst {dimension_numbers = #tpu.dot_dimension_numbers<[1], [0], [0], [1], [0, 0, 1, 1], [], []>} : vector<16x32xf32>, vector<32x32xf32>, vector<16x32xf32> -> vector<16x32xf32>
    %7 = arith.addf %3, %6 : vector<16x32xf32>
    %c0_6 = arith.constant 0 : index
    %c0_7 = arith.constant 0 : index
    %8 = vector.load %arg8[%c0_6, %c0_7] : memref<16x32xf32, #tpu.memory_space<vmem>>, vector<16x32xf32>
    tpu.vector_store %arg8[%c0_6, %c0_7], %7 {strides = array<i32>} : memref<16x32xf32, #tpu.memory_space<vmem>>, vector<16x32xf32>,
    %c0_i32_8 = arith.constant 0 : i32
    %9 = arith.cmpi eq, %arg1, %c0_i32_8 : i32
    %10 = arith.extui %9 : i1 to i32
    %c0_i32_9 = arith.constant 0 : i32
    %11 = arith.cmpi ne, %10, %c0_i32_9 : i32
    scf.if %11 {
      %c0_10 = arith.constant 0 : index
      %c0_11 = arith.constant 0 : index
      %12 = vector.load %arg8[%c0_10, %c0_11] : memref<16x32xf32, #tpu.memory_space<vmem>>, vector<16x32xf32>
      %c0_12 = arith.constant 0 : index
      %c0_13 = arith.constant 0 : index
      %13 = vector.load %arg4[%c0_12, %c0_13] : memref<1x32xf32, #tpu.memory_space<vmem>>, vector<1x32xf32>
      %14 = vector.broadcast %13 : vector<1x32xf32> to vector<16x32xf32>
      %15 = arith.addf %12, %14 : vector<16x32xf32>
      %cst_14 = arith.constant 0.707106769 : f32
      %16 = vector.broadcast %cst_14 : f32 to vector<16x32xf32>
      %17 = arith.mulf %15, %16 : vector<16x32xf32>
      %18 = math.erf %17 : vector<16x32xf32>
      %cst_15 = arith.constant 1.000000e+00 : f32
      %19 = vector.broadcast %cst_15 : f32 to vector<16x32xf32>
      %20 = arith.addf %19, %18 : vector<16x32xf32>
      %21 = arith.mulf %15, %20 : vector<16x32xf32>
      %cst_16 = arith.constant dense<0.000000e+00> : vector<16xf32>
      %22 = vector.multi_reduction <add>, %21, %cst_16 [1] : vector<16x32xf32> to vector<16xf32>
      %23 = vector.shape_cast %22 : vector<16xf32> to vector<16x1xf32>
      %cst_17 = arith.constant 3.200000e+01 : f32
      %24 = vector.broadcast %cst_17 : f32 to vector<16x1xf32>
      %25 = arith.divf %23, %24 : vector<16x1xf32>
      %26 = arith.mulf %21, %21 : vector<16x32xf32>
      %cst_18 = arith.constant dense<0.000000e+00> : vector<16xf32>
      %27 = vector.multi_reduction <add>, %26, %cst_18 [1] : vector<16x32xf32> to vector<16xf32>
      %28 = vector.shape_cast %27 : vector<16xf32> to vector<16x1xf32>
      %cst_19 = arith.constant 3.200000e+01 : f32
      %29 = vector.broadcast %cst_19 : f32 to vector<16x1xf32>
      %30 = arith.divf %28, %29 : vector<16x1xf32>
      %31 = arith.mulf %25, %25 : vector<16x1xf32>
      %32 = arith.subf %30, %31 : vector<16x1xf32>
      %cst_20 = arith.constant 0.000000e+00 : f32
      %33 = vector.broadcast %cst_20 : f32 to vector<16x1xf32>
      %34 = arith.maximumf %32, %33 : vector<16x1xf32>
      %35 = vector.broadcast %25 : vector<16x1xf32> to vector<16x32xf32>
      %36 = arith.subf %21, %35 : vector<16x32xf32>
      %cst_21 = arith.constant 9.99999996E-13 : f32
      %37 = vector.broadcast %cst_21 : f32 to vector<16x1xf32>
      %38 = arith.addf %34, %37 : vector<16x1xf32>
      %39 = math.rsqrt %38 : vector<16x1xf32>
      %40 = vector.broadcast %39 : vector<16x1xf32> to vector<16x32xf32>
      %41 = arith.mulf %36, %40 : vector<16x32xf32>
      %c0_22 = arith.constant 0 : index
      %c0_23 = arith.constant 0 : index
      %42 = vector.load %arg5[%c0_22, %c0_23] : memref<1x32xf32, #tpu.memory_space<vmem>>, vector<1x32xf32>
      %43 = vector.broadcast %42 : vector<1x32xf32> to vector<16x32xf32>
      %44 = arith.mulf %41, %43 : vector<16x32xf32>
      %c0_24 = arith.constant 0 : index
      %c0_25 = arith.constant 0 : index
      %45 = vector.load %arg6[%c0_24, %c0_25] : memref<1x32xf32, #tpu.memory_space<vmem>>, vector<1x32xf32>
      %46 = vector.broadcast %45 : vector<1x32xf32> to vector<16x32xf32>
      %47 = arith.addf %44, %46 : vector<16x32xf32>
      %c0_26 = arith.constant 0 : index
      %c0_27 = arith.constant 0 : index
      %48 = vector.load %arg7[%c0_26, %c0_27] : memref<16x32xf32, #tpu.memory_space<vmem>>, vector<16x32xf32>
      tpu.vector_store %arg7[%c0_26, %c0_27], %47 {strides = array<i32>} : memref<16x32xf32, #tpu.memory_space<vmem>>, vector<16x32xf32>,
    } else {
    }
    return
  }
  func.func @transform_0(%arg0: i32, %arg1: i32) -> (i32, i32) {
    %c0_i32 = arith.constant 0 : i32
    return %arg0, %arg1 : i32, i32
  }
  func.func @transform_1(%arg0: i32, %arg1: i32) -> (i32, i32) {
    %c0_i32 = arith.constant 0 : i32
    %c0_i32_0 = arith.constant 0 : i32
    return %arg1, %c0_i32 : i32, i32
  }
  func.func @transform_2(%arg0: i32, %arg1: i32) -> (i32, i32) {
    %c0_i32 = arith.constant 0 : i32
    %c0_i32_0 = arith.constant 0 : i32
    %c0_i32_1 = arith.constant 0 : i32
    return %c0_i32, %c0_i32_0 : i32, i32
  }
  func.func @transform_3(%arg0: i32, %arg1: i32) -> (i32, i32) {
    %c0_i32 = arith.constant 0 : i32
    %c0_i32_0 = arith.constant 0 : i32
    %c0_i32_1 = arith.constant 0 : i32
    return %c0_i32, %c0_i32_0 : i32, i32
  }
  func.func @transform_4(%arg0: i32, %arg1: i32) -> (i32, i32) {
    %c0_i32 = arith.constant 0 : i32
    %c0_i32_0 = arith.constant 0 : i32
    %c0_i32_1 = arith.constant 0 : i32
    return %c0_i32, %c0_i32_0 : i32, i32
  }
  func.func @transform_5(%arg0: i32, %arg1: i32) -> (i32, i32) {
    %c0_i32 = arith.constant 0 : i32
    %c0_i32_0 = arith.constant 0 : i32
    return %arg0, %c0_i32 : i32, i32
  }
}

</mosaic_0001>

<llo_original>
// kernel: tpu_custom_call.1
$region0: #{tpu_custom_call.1}
  #allocation0 [shape = 'u32[]', space=smem, size = 0x4, offset = 0x4, fixed_abs, tag = 'smem constant byte address 0x4 - core index']
  #allocation1 [shape = 'u32[144,128]{1,0:T(1,128)}', space=vmem, size = 0x12000, scoped, tag = 'internal scratch']
  #allocation2 [shape = 'f32[16,32]{1,0:T(8,128)}', space=vmem, size = 0x2000, scoped, tag = 'scratch operand']
  %s0 = inlined_call_operand.hbm [shape: f32[16,32], index: 0, kind: input, shape index: {}]
  %s1 = inlined_call_operand.hbm [shape: f32[32,32], index: 1, kind: input, shape index: {}]
  %s2 = inlined_call_operand.vmem [shape: f32[1,32], index: 2, kind: input, shape index: {}]
  %s3 = inlined_call_operand.vmem [shape: f32[1,32], index: 3, kind: input, shape index: {}]
  %s4 = inlined_call_operand.vmem [shape: f32[1,32], index: 4, kind: input, shape index: {}]
  %s5 = inlined_call_operand.hbm [shape: f32[16,32], index: 5, kind: output, shape index: {}]
  %s6 = sld [smem:[#allocation0]]
  $region46: #{tpu_custom_call.1} parent=0
    _
  %s8 = ssub.s32 1, %s6
  %s9 = scalar_select 0, %s8, %s6
  $region1: #{tpu_custom_call.1} parent=0
    #allocation3 [shape = 'u8[8192]{0}', space=vmem, size = 0x2000, scoped, tag = 'input window, operand 0, single buffered']
    #allocation4 [shape = 's32[1]{0}', space=sflag, size = 0x4, scoped, tag = 'scoped memory for tpu_custom_call.1']
    #allocation5 [shape = 's32[1]{0}', space=sflag, size = 0x4, scoped, tag = 'scoped memory for tpu_custom_call.1']
    #allocation6 [shape = 'u8[16384]{0}', space=vmem, size = 0x4000, scoped, tag = 'input window, operand 1, single buffered']
    #allocation7 [shape = 's32[1]{0}', space=sflag, size = 0x4, scoped, tag = 'scoped memory for tpu_custom_call.1']
    #allocation8 [shape = 'u8[8192]{0}', space=vmem, size = 0x2000, scoped, tag = 'output window, operand 0, single buffered']
    %10 = vsyncpa [#allocation4], 0
    %11 = vsyncpa [#allocation7], 0
    %12 = vsyncpa [#allocation5], 0
    // Predicated region
    $region2: #{tpu_custom_call.1} parent=1 // pred_check
      _
    $region3: #{tpu_custom_call.1} parent=1 // pred_check_branch
      %14 = sbr.rel (0) target = $region5
    $region4: #{tpu_custom_call.1} parent=1 // pred_region
      %s16 = ssub.s32 256, 256
      %17 = vsyncadd [#allocation4], %s16
      %s18 = sshll.u32 [#allocation3], 4
      %s19 = int_to_ptr.vmem [resolvable:$true] %s18
      %24 = dma.hbm_to_vmem [thread:$0]  %s0, 256, %s19, [#allocation4], 128, 128, 8
    $region5: #{tpu_custom_call.1} parent=1 // pred_fallthru
      _
    // Predicated region
    $region6: #{tpu_custom_call.1} parent=1 // pred_check
      _
    $region7: #{tpu_custom_call.1} parent=1 // pred_check_branch
      %26 = sbr.rel (0) target = $region9
    $region8: #{tpu_custom_call.1} parent=1 // pred_region
      %s28 = ssub.s32 512, 512
      %29 = vsyncadd [#allocation7], %s28
      %s30 = sshll.u32 [#allocation6], 4
      %s31 = int_to_ptr.vmem [resolvable:$true] %s30
      %36 = dma.hbm_to_vmem [thread:$0]  %s1, 512, %s31, [#allocation7], 128, 128, 8
    $region9: #{tpu_custom_call.1} parent=1 // pred_fallthru
      _
    // Predicated region
    $region10: #{tpu_custom_call.1} parent=1 // pred_check
      _
    $region11: #{tpu_custom_call.1} parent=1 // pred_check_branch
      %38 = sbr.rel (0) target = $region13
    $region12: #{tpu_custom_call.1} parent=1 // pred_region
      _
    $region13: #{tpu_custom_call.1} parent=1 // pred_fallthru
      _
    // Predicated region
    $region14: #{tpu_custom_call.1} parent=1 // pred_check
      _
    $region15: #{tpu_custom_call.1} parent=1 // pred_check_branch
      %40 = sbr.rel (0) target = $region17
    $region16: #{tpu_custom_call.1} parent=1 // pred_region
      _
    $region17: #{tpu_custom_call.1} parent=1 // pred_fallthru
      _
    // Predicated region
    $region18: #{tpu_custom_call.1} parent=1 // pred_check
      _
    $region19: #{tpu_custom_call.1} parent=1 // pred_check_branch
      %42 = sbr.rel (0) target = $region21
    $region20: #{tpu_custom_call.1} parent=1 // pred_region
      _
    $region21: #{tpu_custom_call.1} parent=1 // pred_fallthru
      _
    // Predicated region
    $region22: #{tpu_custom_call.1} parent=1 // pred_check
      _
    $region23: #{tpu_custom_call.1} parent=1 // pred_check_branch
      %44 = sbr.rel (0) target = $region25
    $region24: #{tpu_custom_call.1} parent=1 // pred_region
      %45 = dma.done [#allocation4], 256
    $region25: #{tpu_custom_call.1} parent=1 // pred_fallthru
      _
    // Predicated region
    $region26: #{tpu_custom_call.1} parent=1 // pred_check
      _
    $region27: #{tpu_custom_call.1} parent=1 // pred_check_branch
      %47 = sbr.rel (0) target = $region29
    $region28: #{tpu_custom_call.1} parent=1 // pred_region
      %48 = dma.done [#allocation7], 512
    $region29: #{tpu_custom_call.1} parent=1 // pred_fallthru
      _
    %p49 = scmp.eq.s32.totalorder 0, 0
    // Predicated region
    $region30: #{tpu_custom_call.1} parent=1 // pred_check
      %p50 = pneg %p49
    $region31: #{tpu_custom_call.1} parent=1 // pred_check_branch
      %52 = sbr.rel (%p50) target = $region33
    $region32: #{tpu_custom_call.1} parent=1 // pred_region
      %vm53 = vcmask 261120
      %54 = vst.msk [vmem:[#allocation2] sm:$0xff] %vm53, 0.0
      %55 = vst.msk [vmem:[#allocation2 + $0x8] sm:$0xff] %vm53, 0.0
    $region33: #{tpu_custom_call.1} parent=1 // pred_fallthru
      _
    %v56 = vld [vmem:[#allocation2] sm:$0xff]
    %v57 = vld [vmem:[#allocation2 + $0x8] sm:$0xff]
    %v58 = vld [vmem:[#allocation3] sm:$0xff]
    %v59 = vld [vmem:[#allocation3 + $0x8] sm:$0xff]
    %v60 = vld [vmem:[#allocation6] sm:$0xff]
    %v61 = vld [vmem:[#allocation6 + $0x8] sm:$0xff]
    %v62 = vld [vmem:[#allocation6 + $0x10] sm:$0xff]
    %v63 = vld [vmem:[#allocation6 + $0x18] sm:$0xff]
    %vm64 = vcmask 261120
    %v66 = vsel %vm64, %v58, 0
    %v69 = vsel %vm64, %v59, 0
    %71 = vmatprep.subr.mxu0 0.0
    %72 = vmatpush1.msra.mxu0 0.0
    %73 = vmatprep.subr.mxu0 0.0
    %74 = vmatpush1.msra.mxu0 0.0
    %75 = vmatprep.subr.mxu0 0.0
    %76 = vmatpush1.msra.mxu0 0.0
    %77 = vmatprep.subr.mxu0 0.0
    %78 = vmatpush1.msra.mxu0 0.0
    %79 = vmatprep.subr.mxu0 0.0
    %80 = vmatpush1.msra.mxu0 0.0
    %81 = vmatprep.subr.mxu0 0.0
    %82 = vmatpush1.msra.mxu0 0.0
    %83 = vmatprep.subr.mxu0 0.0
    %84 = vmatpush1.msra.mxu0 0.0
    %85 = vmatprep.subr.mxu0 0.0
    %86 = vmatpush1.msra.mxu0 0.0
    %87 = vmatprep.subr.mxu0 0.0
    %88 = vmatpush1.msra.mxu0 0.0
    %89 = vmatprep.subr.mxu0 0.0
    %90 = vmatpush1.msra.mxu0 0.0
    %91 = vmatprep.subr.mxu0 0.0
    %92 = vmatpush1.msra.mxu0 0.0
    %93 = vmatprep.subr.mxu0 0.0
    %94 = vmatpush1.msra.mxu0 0.0
    %95 = vmatprep.subr.mxu0 0.0
    %96 = vmatpush1.msra.mxu0 %v63
    %97 = vmatprep.subr.mxu0 0.0
    %98 = vmatpush1.msra.mxu0 %v62
    %99 = vmatprep.subr.mxu0 0.0
    %100 = vmatpush1.msra.mxu0 %v61
    %101 = vmatprep.subr.mxu0 0.0
    %102 = vmatpush1.msra.mxu0 %v60
    %103 = vmatprep.subr.mxu0 0.0
    %104 = vmatpush2.msra.mxu0 0.0
    %105 = vmatprep.subr.mxu0 0.0
    %106 = vmatpush2.msra.mxu0 0.0
    %107 = vmatprep.subr.mxu0 0.0
    %108 = vmatpush2.msra.mxu0 0.0
    %109 = vmatprep.subr.mxu0 0.0
    %110 = vmatpush2.msra.mxu0 0.0
    %111 = vmatprep.subr.mxu0 0.0
    %112 = vmatpush2.msra.mxu0 0.0
    %113 = vmatprep.subr.mxu0 0.0
    %114 = vmatpush2.msra.mxu0 0.0
    %115 = vmatprep.subr.mxu0 0.0
    %116 = vmatpush2.msra.mxu0 0.0
    %117 = vmatprep.subr.mxu0 0.0
    %118 = vmatpush2.msra.mxu0 0.0
    %119 = vmatprep.subr.mxu0 0.0
    %120 = vmatpush2.msra.mxu0 0.0
    %121 = vmatprep.subr.mxu0 0.0
    %122 = vmatpush2.msra.mxu0 0.0
    %123 = vmatprep.subr.mxu0 0.0
    %124 = vmatpush2.msra.mxu0 0.0
    %125 = vmatprep.subr.mxu0 0.0
    %126 = vmatpush2.msra.mxu0 0.0
    %127 = vmatprep.subr.mxu0 0.0
    %128 = vmatpush2.msra.mxu0 0.0
    %129 = vmatprep.subr.mxu0 0.0
    %130 = vmatpush2.msra.mxu0 0.0
    %131 = vmatprep.subr.mxu0 0.0
    %132 = vmatpush2.msra.mxu0 0.0
    %133 = vmatprep.subr.mxu0 0.0
    %134 = vmatpush2.msra.mxu0 0.0
    %135 = vmatprep.mubr.f32.mxu0 0.0
    %136 = vmatmul.mubr.f32.gmra.mxu0 %v66
    %v137 = vpop.f32.mrf.mxu0
    %v138 = vadd.f32 0.0, %v137
    %v139 = vpop.f32.mrf.mxu0
    %140 = vmatprep.mubr.f32.mxu0 0.0
    %141 = vmatmul.mubr.f32.gmra.mxu0 %v69
    %v142 = vpop.f32.mrf.mxu0
    %v143 = vadd.f32 0.0, %v142
    %v144 = vpop.f32.mrf.mxu0
    %145 = vdwg.mxu0
    %v146 = vadd.f32 %v56, %v138
    %v147 = vadd.f32 %v57, %v143
    %148 = vst.msk [vmem:[#allocation2] sm:$0xff] %vm64, %v146
    %149 = vst.msk [vmem:[#allocation2 + $0x8] sm:$0xff] %vm64, %v147
    // Predicated region
    $region34: #{tpu_custom_call.1} parent=1 // pred_check
      %p150 = pneg %p49
    $region35: #{tpu_custom_call.1} parent=1 // pred_check_branch
      %152 = sbr.rel (%p150) target = $region37
    $region36: #{tpu_custom_call.1} parent=1 // pred_region
      %v153 = vld [vmem:[#allocation2] sm:$0xff]
      %v154 = vld [vmem:[#allocation2 + $0x8] sm:$0xff]
      %v155 = vld [vmem:[%s2] sm:$0x1]
      %v157 = vlaneseq
      %v158 = vshrl.u32 %v157, 7
      %v159 = vsub.s32 0, %v158
      %v160 = vrot.slane %v155, %v159
      %v162 = vadd.f32 %v153, %v160
      %v163 = vadd.f32 %v154, %v160
      %v164 = vmul.f32 %v162, 0.70710677
      %v165 = vmul.f32 %v163, 0.70710677
      %v166 = verf.f32.pop %v164
      %v167 = verf.f32.pop %v165
      %v168 = vadd.f32 %v166, 1.0
      %v169 = vadd.f32 %v167, 1.0
      %v170 = vmul.f32 %v162, %v168
      %v171 = vmul.f32 %v163, %v169
      %v172 = vsel %vm64, %v170, 0.0
      %173 = vadd.xlane.f32.xlu0 %v172
      %v174 = vpop.xlane.xlu0 %173
      %v175 = vsel %vm64, %v171, 0.0
      %176 = vadd.xlane.f32.xlu0 %v175
      %v177 = vpop.xlane.xlu0 %176
      %v178 = vrcp.pop 32.0
      %v179 = vmul.f32 %v174, %v178
      %v180 = vmul.f32 %v177, %v178
      %v181 = vmul.f32 %v170, %v170
      %v182 = vmul.f32 %v171, %v171
      %v183 = vsel %vm64, %v181, 0.0
      %184 = vadd.xlane.f32.xlu0 %v183
      %v185 = vpop.xlane.xlu0 %184
      %v186 = vsel %vm64, %v182, 0.0
      %187 = vadd.xlane.f32.xlu0 %v186
      %v188 = vpop.xlane.xlu0 %187
      %v189 = vmul.f32 %v185, %v178
      %v190 = vmul.f32 %v188, %v178
      %v191 = vmul.f32 %v179, %v179
      %v192 = vmul.f32 %v180, %v180
      %v193 = vsub.f32 %v189, %v191
      %v194 = vsub.f32 %v190, %v192
      %v195 = vmax.f32 %v193, 0.0
      %v196 = vmax.f32 %v194, 0.0
      %v197 = vsub.f32 %v170, %v179
      %v198 = vsub.f32 %v171, %v180
      %v199 = vadd.f32 %v195, 1e-12
      %v200 = vadd.f32 %v196, 1e-12
      %v201 = vrsqrt.pop %v199
      %v202 = vrsqrt.pop %v200
      %v203 = vmul.f32 %v197, %v201
      %v204 = vmul.f32 %v198, %v202
      %v205 = vld [vmem:[%s3] sm:$0x1]
      %v207 = vlaneseq
      %v208 = vshrl.u32 %v207, 7
      %v209 = vsub.s32 0, %v208
      %v210 = vrot.slane %v205, %v209
      %v212 = vmul.f32 %v203, %v210
      %v213 = vmul.f32 %v204, %v210
      %v214 = vld [vmem:[%s4] sm:$0x1]
      %v216 = vlaneseq
      %v217 = vshrl.u32 %v216, 7
      %v218 = vsub.s32 0, %v217
      %v219 = vrot.slane %v214, %v218
      %v221 = vadd.f32 %v212, %v219
      %v222 = vadd.f32 %v213, %v219
      %223 = vst.msk [vmem:[#allocation8] sm:$0xff] %vm64, %v221
      %224 = vst.msk [vmem:[#allocation8 + $0x8] sm:$0xff] %vm64, %v222
    $region37: #{tpu_custom_call.1} parent=1 // pred_fallthru
      _
    // Predicated region
    $region38: #{tpu_custom_call.1} parent=1 // pred_check
      _
    $region39: #{tpu_custom_call.1} parent=1 // pred_check_branch
      %226 = sbr.rel (0) target = $region41
    $region40: #{tpu_custom_call.1} parent=1 // pred_region
      %s228 = ssub.s32 256, 256
      %229 = vsyncadd [#allocation5], %s228
      %s230 = sshll.u32 [#allocation8], 4
      %s231 = int_to_ptr.vmem [resolvable:$true] %s230
      %236 = dma.vmem_to_hbm [thread:$0]  %s231, 256, %s5, [#allocation5], 128, 128, 8
    $region41: #{tpu_custom_call.1} parent=1 // pred_fallthru
      _
    // Predicated region
    $region42: #{tpu_custom_call.1} parent=1 // pred_check
      _
    $region43: #{tpu_custom_call.1} parent=1 // pred_check_branch
      %238 = sbr.rel (0) target = $region45
    $region44: #{tpu_custom_call.1} parent=1 // pred_region
      %239 = dma.done [#allocation5], 256
    $region45: #{tpu_custom_call.1} parent=1 // pred_fallthru
      _
    %240 = vsyncpa [#allocation4], 1
    %241 = vsyncpa [#allocation7], 1
    %242 = vsyncpa [#allocation5], 1

// kernel: tpu_custom_call.1
$region0: #{tpu_custom_call.1}
  #allocation0 [shape = 'u32[]', space=smem, size = 0x4, offset = 0x4, fixed_abs, tag = 'smem constant byte address 0x4 - core index']
  #allocation1 [shape = 'u32[144,128]{1,0:T(1,128)}', space=vmem, size = 0x12000, scoped, tag = 'internal scratch']
  #allocation2 [shape = 'f32[16,32]{1,0:T(8,128)}', space=vmem, size = 0x2000, scoped, tag = 'scratch operand']
  %s0 = inlined_call_operand.hbm [shape: f32[16,32], index: 0, kind: input, shape index: {}]
  %s1 = inlined_call_operand.hbm [shape: f32[32,32], index: 1, kind: input, shape index: {}]
  %s2 = inlined_call_operand.vmem [shape: f32[1,32], index: 2, kind: input, shape index: {}]
  %s3 = inlined_call_operand.vmem [shape: f32[1,32], index: 3, kind: input, shape index: {}]
  %s4 = inlined_call_operand.vmem [shape: f32[1,32], index: 4, kind: input, shape index: {}]
  %s5 = inlined_call_operand.hbm [shape: f32[16,32], index: 5, kind: output, shape index: {}]
  %s6 = sld [smem:[#allocation0]]
  $region46: #{tpu_custom_call.1} parent=0
    _
  %s8 = ssub.s32 1, %s6
  %s9 = scalar_select 0, %s8, %s6
  $region1: #{tpu_custom_call.1} parent=0
    #allocation3 [shape = 'u8[8192]{0}', space=vmem, size = 0x2000, scoped, tag = 'input window, operand 0, single buffered']
    #allocation4 [shape = 's32[1]{0}', space=sflag, size = 0x4, scoped, tag = 'scoped memory for tpu_custom_call.1']
    #allocation5 [shape = 's32[1]{0}', space=sflag, size = 0x4, scoped, tag = 'scoped memory for tpu_custom_call.1']
    #allocation6 [shape = 'u8[16384]{0}', space=vmem, size = 0x4000, scoped, tag = 'input window, operand 1, single buffered']
    #allocation7 [shape = 's32[1]{0}', space=sflag, size = 0x4, scoped, tag = 'scoped memory for tpu_custom_call.1']
    #allocation8 [shape = 'u8[8192]{0}', space=vmem, size = 0x2000, scoped, tag = 'output window, operand 0, single buffered']
    %10 = vsyncpa [#allocation4], 0
    %11 = vsyncpa [#allocation7], 0
    %12 = vsyncpa [#allocation5], 0
    // Predicated region
    $region2: #{tpu_custom_call.1} parent=1 // pred_check
      _
    $region3: #{tpu_custom_call.1} parent=1 // pred_check_branch
      %14 = sbr.rel (0) target = $region5
    $region4: #{tpu_custom_call.1} parent=1 // pred_region
      %s16 = ssub.s32 256, 256
      %17 = vsyncadd [#allocation4], %s16
      %s18 = sshll.u32 [#allocation3], 4
      %s19 = int_to_ptr.vmem [resolvable:$true] %s18
      %24 = dma.hbm_to_vmem [thread:$0]  %s0, 256, %s19, [#allocation4], 128, 128, 8
    $region5: #{tpu_custom_call.1} parent=1 // pred_fallthru
      _
    // Predicated region
    $region6: #{tpu_custom_call.1} parent=1 // pred_check
      _
    $region7: #{tpu_custom_call.1} parent=1 // pred_check_branch
      %26 = sbr.rel (0) target = $region9
    $region8: #{tpu_custom_call.1} parent=1 // pred_region
      %s28 = ssub.s32 512, 512
      %29 = vsyncadd [#allocation7], %s28
      %s30 = sshll.u32 [#allocation6], 4
      %s31 = int_to_ptr.vmem [resolvable:$true] %s30
      %36 = dma.hbm_to_vmem [thread:$0]  %s1, 512, %s31, [#allocation7], 128, 128, 8
    $region9: #{tpu_custom_call.1} parent=1 // pred_fallthru
      _
    // Predicated region
    $region10: #{tpu_custom_call.1} parent=1 // pred_check
      _
    $region11: #{tpu_custom_call.1} parent=1 // pred_check_branch
      %38 = sbr.rel (0) target = $region13
    $region12: #{tpu_custom_call.1} parent=1 // pred_region
      _
    $region13: #{tpu_custom_call.1} parent=1 // pred_fallthru
      _
    // Predicated region
    $region14: #{tpu_custom_call.1} parent=1 // pred_check
      _
    $region15: #{tpu_custom_call.1} parent=1 // pred_check_branch
      %40 = sbr.rel (0) target = $region17
    $region16: #{tpu_custom_call.1} parent=1 // pred_region
      _
    $region17: #{tpu_custom_call.1} parent=1 // pred_fallthru
      _
    // Predicated region
    $region18: #{tpu_custom_call.1} parent=1 // pred_check
      _
    $region19: #{tpu_custom_call.1} parent=1 // pred_check_branch
      %42 = sbr.rel (0) target = $region21
    $region20: #{tpu_custom_call.1} parent=1 // pred_region
      _
    $region21: #{tpu_custom_call.1} parent=1 // pred_fallthru
      _
    // Predicated region
    $region22: #{tpu_custom_call.1} parent=1 // pred_check
      _
    $region23: #{tpu_custom_call.1} parent=1 // pred_check_branch
      %44 = sbr.rel (0) target = $region25
    $region24: #{tpu_custom_call.1} parent=1 // pred_region
      %45 = dma.done [#allocation4], 256
    $region25: #{tpu_custom_call.1} parent=1 // pred_fallthru
      _
    // Predicated region
    $region26: #{tpu_custom_call.1} parent=1 // pred_check
      _
    $region27: #{tpu_custom_call.1} parent=1 // pred_check_branch
      %47 = sbr.rel (0) target = $region29
    $region28: #{tpu_custom_call.1} parent=1 // pred_region
      %48 = dma.done [#allocation7], 512
    $region29: #{tpu_custom_call.1} parent=1 // pred_fallthru
      _
    %p49 = scmp.eq.s32.totalorder 0, 0
    // Predicated region
    $region30: #{tpu_custom_call.1} parent=1 // pred_check
      %p50 = pneg %p49
    $region31: #{tpu_custom_call.1} parent=1 // pred_check_branch
      %52 = sbr.rel (%p50) target = $region33
    $region32: #{tpu_custom_call.1} parent=1 // pred_region
      %vm53 = vcmask 261120
      %54 = vst.msk [vmem:[#allocation2] sm:$0xff] %vm53, 0.0
      %55 = vst.msk [vmem:[#allocation2 + $0x8] sm:$0xff] %vm53, 0.0
    $region33: #{tpu_custom_call.1} parent=1 // pred_fallthru
      _
    %v56 = vld [vmem:[#allocation2] sm:$0xff]
    %v57 = vld [vmem:[#allocation2 + $0x8] sm:$0xff]
    %v58 = vld [vmem:[#allocation3] sm:$0xff]
    %v59 = vld [vmem:[#allocation3 + $0x8] sm:$0xff]
    %v60 = vld [vmem:[#allocation6] sm:$0xff]
    %v61 = vld [vmem:[#allocation6 + $0x8] sm:$0xff]
    %v62 = vld [vmem:[#allocation6 + $0x10] sm:$0xff]
    %v63 = vld [vmem:[#allocation6 + $0x18] sm:$0xff]
    %vm64 = vcmask 261120
    %v66 = vsel %vm64, %v58, 0
    %v69 = vsel %vm64, %v59, 0
    %71 = vmatprep.subr.mxu0 0.0
    %72 = vmatpush1.msra.mxu0 0.0
    %73 = vmatprep.subr.mxu0 0.0
    %74 = vmatpush1.msra.mxu0 0.0
    %75 = vmatprep.subr.mxu0 0.0
    %76 = vmatpush1.msra.mxu0 0.0
    %77 = vmatprep.subr.mxu0 0.0
    %78 = vmatpush1.msra.mxu0 0.0
    %79 = vmatprep.subr.mxu0 0.0
    %80 = vmatpush1.msra.mxu0 0.0
    %81 = vmatprep.subr.mxu0 0.0
    %82 = vmatpush1.msra.mxu0 0.0
    %83 = vmatprep.subr.mxu0 0.0
    %84 = vmatpush1.msra.mxu0 0.0
    %85 = vmatprep.subr.mxu0 0.0
    %86 = vmatpush1.msra.mxu0 0.0
    %87 = vmatprep.subr.mxu0 0.0
    %88 = vmatpush1.msra.mxu0 0.0
    %89 = vmatprep.subr.mxu0 0.0
    %90 = vmatpush1.msra.mxu0 0.0
    %91 = vmatprep.subr.mxu0 0.0
    %92 = vmatpush1.msra.mxu0 0.0
    %93 = vmatprep.subr.mxu0 0.0
    %94 = vmatpush1.msra.mxu0 0.0
    %95 = vmatprep.subr.mxu0 0.0
    %96 = vmatpush1.msra.mxu0 %v63
    %97 = vmatprep.subr.mxu0 0.0
    %98 = vmatpush1.msra.mxu0 %v62
    %99 = vmatprep.subr.mxu0 0.0
    %100 = vmatpush1.msra.mxu0 %v61
    %101 = vmatprep.subr.mxu0 0.0
    %102 = vmatpush1.msra.mxu0 %v60
    %103 = vmatprep.subr.mxu0 0.0
    %104 = vmatpush2.msra.mxu0 0.0
    %105 = vmatprep.subr.mxu0 0.0
    %106 = vmatpush2.msra.mxu0 0.0
    %107 = vmatprep.subr.mxu0 0.0
    %108 = vmatpush2.msra.mxu0 0.0
    %109 = vmatprep.subr.mxu0 0.0
    %110 = vmatpush2.msra.mxu0 0.0
    %111 = vmatprep.subr.mxu0 0.0
    %112 = vmatpush2.msra.mxu0 0.0
    %113 = vmatprep.subr.mxu0 0.0
    %114 = vmatpush2.msra.mxu0 0.0
    %115 = vmatprep.subr.mxu0 0.0
    %116 = vmatpush2.msra.mxu0 0.0
    %117 = vmatprep.subr.mxu0 0.0
    %118 = vmatpush2.msra.mxu0 0.0
    %119 = vmatprep.subr.mxu0 0.0
    %120 = vmatpush2.msra.mxu0 0.0
    %121 = vmatprep.subr.mxu0 0.0
    %122 = vmatpush2.msra.mxu0 0.0
    %123 = vmatprep.subr.mxu0 0.0
    %124 = vmatpush2.msra.mxu0 0.0
    %125 = vmatprep.subr.mxu0 0.0
    %126 = vmatpush2.msra.mxu0 0.0
    %127 = vmatprep.subr.mxu0 0.0
    %128 = vmatpush2.msra.mxu0 0.0
    %129 = vmatprep.subr.mxu0 0.0
    %130 = vmatpush2.msra.mxu0 0.0
    %131 = vmatprep.subr.mxu0 0.0
    %132 = vmatpush2.msra.mxu0 0.0
    %133 = vmatprep.subr.mxu0 0.0
    %134 = vmatpush2.msra.mxu0 0.0
    %135 = vmatprep.mubr.f32.mxu0 0.0
    %136 = vmatmul.mubr.f32.gmra.mxu0 %v66
    %v137 = vpop.f32.mrf.mxu0
    %v138 = vadd.f32 0.0, %v137
    %v139 = vpop.f32.mrf.mxu0
    %140 = vmatprep.mubr.f32.mxu0 0.0
    %141 = vmatmul.mubr.f32.gmra.mxu0 %v69
    %v142 = vpop.f32.mrf.mxu0
    %v143 = vadd.f32 0.0, %v142
    %v144 = vpop.f32.mrf.mxu0
    %145 = vdwg.mxu0
    %v146 = vadd.f32 %v56, %v138
    %v147 = vadd.f32 %v57, %v143
    %148 = vst.msk [vmem:[#allocation2] sm:$0xff] %vm64, %v146
    %149 = vst.msk [vmem:[#allocation2 + $0x8] sm:$0xff] %vm64, %v147
    // Predicated region
    $region34: #{tpu_custom_call.1} parent=1 // pred_check
      %p150 = pneg %p49
    $region35: #{tpu_custom_call.1} parent=1 // pred_check_branch
      %152 = sbr.rel (%p150) target = $region37
    $region36: #{tpu_custom_call.1} parent=1 // pred_region
      %v153 = vld [vmem:[#allocation2] sm:$0xff]
      %v154 = vld [vmem:[#allocation2 + $0x8] sm:$0xff]
      %v155 = vld [vmem:[%s2] sm:$0x1]
      %v157 = vlaneseq
      %v158 = vshrl.u32 %v157, 7
      %v159 = vsub.s32 0, %v158
      %v160 = vrot.slane %v155, %v159
      %v162 = vadd.f32 %v153, %v160
      %v163 = vadd.f32 %v154, %v160
      %v164 = vmul.f32 %v162, 0.70710677
      %v165 = vmul.f32 %v163, 0.70710677
      %v166 = verf.f32.pop %v164
      %v167 = verf.f32.pop %v165
      %v168 = vadd.f32 %v166, 1.0
      %v169 = vadd.f32 %v167, 1.0
      %v170 = vmul.f32 %v162, %v168
      %v171 = vmul.f32 %v163, %v169
      %v172 = vsel %vm64, %v170, 0.0
      %173 = vadd.xlane.f32.xlu0 %v172
      %v174 = vpop.xlane.xlu0 %173
      %v175 = vsel %vm64, %v171, 0.0
      %176 = vadd.xlane.f32.xlu0 %v175
      %v177 = vpop.xlane.xlu0 %176
      %v178 = vrcp.pop 32.0
      %v179 = vmul.f32 %v174, %v178
      %v180 = vmul.f32 %v177, %v178
      %v181 = vmul.f32 %v170, %v170
      %v182 = vmul.f32 %v171, %v171
      %v183 = vsel %vm64, %v181, 0.0
      %184 = vadd.xlane.f32.xlu0 %v183
      %v185 = vpop.xlane.xlu0 %184
      %v186 = vsel %vm64, %v182, 0.0
      %187 = vadd.xlane.f32.xlu0 %v186
      %v188 = vpop.xlane.xlu0 %187
      %v189 = vmul.f32 %v185, %v178
      %v190 = vmul.f32 %v188, %v178
      %v191 = vmul.f32 %v179, %v179
      %v192 = vmul.f32 %v180, %v180
      %v193 = vsub.f32 %v189, %v191
      %v194 = vsub.f32 %v190, %v192
      %v195 = vmax.f32 %v193, 0.0
      %v196 = vmax.f32 %v194, 0.0
      %v197 = vsub.f32 %v170, %v179
      %v198 = vsub.f32 %v171, %v180
      %v199 = vadd.f32 %v195, 1e-12
      %v200 = vadd.f32 %v196, 1e-12
      %v201 = vrsqrt.pop %v199
      %v202 = vrsqrt.pop %v200
      %v203 = vmul.f32 %v197, %v201
      %v204 = vmul.f32 %v198, %v202
      %v205 = vld [vmem:[%s3] sm:$0x1]
      %v207 = vlaneseq
      %v208 = vshrl.u32 %v207, 7
      %v209 = vsub.s32 0, %v208
      %v210 = vrot.slane %v205, %v209
      %v212 = vmul.f32 %v203, %v210
      %v213 = vmul.f32 %v204, %v210
      %v214 = vld [vmem:[%s4] sm:$0x1]
      %v216 = vlaneseq
      %v217 = vshrl.u32 %v216, 7
      %v218 = vsub.s32 0, %v217
      %v219 = vrot.slane %v214, %v218
      %v221 = vadd.f32 %v212, %v219
      %v222 = vadd.f32 %v213, %v219
      %223 = vst.msk [vmem:[#allocation8] sm:$0xff] %vm64, %v221
      %224 = vst.msk [vmem:[#allocation8 + $0x8] sm:$0xff] %vm64, %v222
    $region37: #{tpu_custom_call.1} parent=1 // pred_fallthru
      _
    // Predicated region
    $region38: #{tpu_custom_call.1} parent=1 // pred_check
      _
    $region39: #{tpu_custom_call.1} parent=1 // pred_check_branch
      %226 = sbr.rel (0) target = $region41
    $region40: #{tpu_custom_call.1} parent=1 // pred_region
      %s228 = ssub.s32 256, 256
      %229 = vsyncadd [#allocation5], %s228
      %s230 = sshll.u32 [#allocation8], 4
      %s231 = int_to_ptr.vmem [resolvable:$true] %s230
      %236 = dma.vmem_to_hbm [thread:$0]  %s231, 256, %s5, [#allocation5], 128, 128, 8
    $region41: #{tpu_custom_call.1} parent=1 // pred_fallthru
      _
    // Predicated region
    $region42: #{tpu_custom_call.1} parent=1 // pred_check
      _
    $region43: #{tpu_custom_call.1} parent=1 // pred_check_branch
      %238 = sbr.rel (0) target = $region45
    $region44: #{tpu_custom_call.1} parent=1 // pred_region
      %239 = dma.done [#allocation5], 256
    $region45: #{tpu_custom_call.1} parent=1 // pred_fallthru
      _
    %240 = vsyncpa [#allocation4], 1
    %241 = vsyncpa [#allocation7], 1
    %242 = vsyncpa [#allocation5], 1

</llo_original>
